<compile_context>
chip_gen: v6e
topology: v6e:2x2x1
jax: 0.10.0
libtpu: 0.0.40
codegen_flags: <defaults>
</compile_context>

<pallas_src>
import functools
import math

import jax
import jax.numpy as jnp
from jax import lax
from jax.experimental import pallas as pl
from jax.experimental.pallas import tpu as pltpu

_RAD2DEG = 180.0 / math.pi

# Abramowitz & Stegun 4.4.47 minimax coefficients for acos(|x|), |err| <= ~2e-8 rad.
# Ordered from the highest-degree term down to the constant.
_ACOS_COEFFS = (-0.0012624911, 0.0066700901, -0.0170881256, 0.0308918810,
                -0.0501743046, 0.0889789874, -0.2145988016, 1.5707963050)


def _acos(x):
  """acos(x), x in [-1, 1]: sqrt(1-|x|)*poly(|x|) (Estrin), reflected for x < 0."""
  ax = jnp.abs(x)
  c0, c1, c2, c3, c4, c5, c6, c7 = _ACOS_COEFFS
  x2 = ax * ax
  x4 = x2 * x2
  p01 = c0 * ax + c1
  p23 = c2 * ax + c3
  p45 = c4 * ax + c5
  p67 = c6 * ax + c7
  p = (p01 * x2 + p23) * x4 + (p45 * x2 + p67)
  r = jnp.sqrt(jnp.maximum(1.0 - ax, 0.0)) * p     # sqrt runs in parallel with poly
  return jnp.where(x >= 0.0, r, jnp.float32(math.pi) - r)


def _gaze_loss_kernel(o3_ref, o2_ref, tgt_ref, loss_ref, *, target_dim):
  """Refs are transposed: o3_ref (3, B), o2_ref (2, B), tgt_ref (target_dim, B)."""
  f32 = jnp.float32
  b = o3_ref.shape[1]

  # Lane-dense sublane-row loads; upcast in-kernel (supports bf16 inputs, v5e VPU).
  o3x = o3_ref[0:1, :].astype(f32)
  o3y = o3_ref[1:2, :].astype(f32)
  o2x = o2_ref[0:1, :].astype(f32)
  o2y = o2_ref[1:2, :].astype(f32)
  tx = tgt_ref[0:1, :].astype(f32)
  ty = tgt_ref[1:2, :].astype(f32)

  # Shared squared norms — pure VPU elementwise, no cross-lane work.
  ss_o3_2d = o3x * o3x + o3y * o3y
  ss_o2 = o2x * o2x + o2y * o2y
  ss_t2 = tx * tx + ty * ty

  # ---- loss_self: mean L1 of F.normalize(o3[:, :2], eps=1e-12) vs
  #      F.normalize(o2, eps=1e-12); x / max(||x||, e) == x * rsqrt(max(||x||^2, e^2)).
  inv_a = lax.rsqrt(jnp.maximum(ss_o3_2d, 1e-24))
  inv_c = lax.rsqrt(jnp.maximum(ss_o2, 1e-24))
  dx = o3x * inv_a - o2x * inv_c
  dy = o3y * inv_a - o2y * inv_c
  self_rows = jnp.concatenate([jnp.abs(dx), jnp.abs(dy)], axis=0)      # (2, B)

  # ---- AngularArcossLoss (single-normalization form; equals the reference's
  #      double-normalize + clamp for any vector with norm >= 1e-8).
  inv_o2 = lax.rsqrt(jnp.maximum(ss_o2, 1e-16))
  inv_t2 = lax.rsqrt(jnp.maximum(ss_t2, 1e-16))
  if target_dim == 3:
    o3z = o3_ref[2:3, :].astype(f32)
    tz = tgt_ref[2:3, :].astype(f32)
    ss_o3 = ss_o3_2d + o3z * o3z
    ss_t3 = ss_t2 + tz * tz
    dot3 = o3x * tx + o3y * ty + o3z * tz
    sim3 = dot3 * (lax.rsqrt(jnp.maximum(ss_o3, 1e-16)) *
                   lax.rsqrt(jnp.maximum(ss_t3, 1e-16)))
  else:
    dot3 = o3x * tx + o3y * ty
    sim3 = dot3 * (lax.rsqrt(jnp.maximum(ss_o3_2d, 1e-16)) * inv_t2)
  dot2 = o2x * tx + o2y * ty
  sim2 = dot2 * (inv_o2 * inv_t2)

  # One clamp + one acos evaluation over both similarity vectors.
  sims = jnp.concatenate([sim3, sim2], axis=0)                         # (2, B)
  sims = jnp.clip(sims, -1.0 + 1e-8, 1.0 - 1e-8)
  ang = _acos(sims)                                                    # radians

  # ---- single reduce-to-scalar for all three loss terms.
  total = ang * (_RAD2DEG / b) + self_rows * (1.0 / (2.0 * b))
  loss_ref[0, 0] = jnp.sum(total)


@jax.jit
def gaze_loss_multi(output_3d, output_2d, target, var_o=None):
  """JAX/Pallas equivalent of GazeLossMulti.forward (inputs in PyTorch (B, D) layout)."""
  # TODO(synk): var_o / PinBallLoss is constructed but never used in
  # GazeLossMulti.forward, so it is intentionally not computed here.
  del var_o
  target_dim = target.shape[1]
  kernel = functools.partial(_gaze_loss_kernel, target_dim=target_dim)
  loss = pl.pallas_call(
      kernel,
      in_specs=[pl.BlockSpec(memory_space=pltpu.MemorySpace.VMEM)] * 3,
      out_specs=pl.BlockSpec(memory_space=pltpu.MemorySpace.SMEM),
      out_shape=jax.ShapeDtypeStruct((1, 1), jnp.float32),
  )(jnp.transpose(output_3d),   # (3, B) — batch on lanes (layout plumbing only,
    jnp.transpose(output_2d),   # (2, B)   fused into this one jitted executable)
    jnp.transpose(target))      # (target_dim, B)
  return loss[0, 0]


def _reference(output_3d, output_2d, target):
  """Pure-JAX reference mirroring the PyTorch module exactly (uses jnp.arccos)."""
  def l2norm(x, eps):
    n = jnp.sqrt(jnp.sum(x * x, axis=1, keepdims=True))
    return x / jnp.maximum(n, eps)

  def cosine_loss(o, t):
    ov = l2norm(o, 1e-8)
    tv = l2norm(t, 1e-8)
    dot = jnp.sum(ov * tv, axis=1)
    denom = jnp.maximum(jnp.linalg.norm(ov, axis=1) * jnp.linalg.norm(tv, axis=1), 1e-8)
    sim = jnp.clip(dot / denom, -1.0 + 1e-8, 1.0 - 1e-8)
    return jnp.mean(jnp.arccos(sim)) * 180.0 / math.pi

  a = l2norm(output_3d[:, :2], 1e-12)
  b = l2norm(output_2d, 1e-12)
  loss_self = jnp.mean(jnp.abs(a - b))
  if target.shape[1] == 3:
    l3 = cosine_loss(output_3d, target)
    l2 = cosine_loss(output_2d, target[:, :2])
  else:
    l3 = cosine_loss(output_3d[:, :2], target[:, :2])
    l2 = cosine_loss(output_2d, target[:, :2])
  return loss_self + l3 + l2


if __name__ == "__main__":
  key = jax.random.PRNGKey(0)
  k1, k2, k3, k4 = jax.random.split(key, 4)
  B = 8
  output_3d = jax.random.normal(k1, (B, 3), dtype=jnp.float32)
  output_2d = jax.random.normal(k2, (B, 2), dtype=jnp.float32)
  target3 = jax.random.normal(k3, (B, 3), dtype=jnp.float32)
  var_o = jax.nn.softplus(jax.random.normal(k4, (B, 3), dtype=jnp.float32))  # unused by forward

  # 3-D target branch.
  loss3 = jax.block_until_ready(gaze_loss_multi(output_3d, output_2d, target3, var_o))
  ref3 = jax.block_until_ready(_reference(output_3d, output_2d, target3))
  assert jnp.allclose(loss3, ref3, rtol=5e-4, atol=5e-4), (loss3, ref3)

  # 2-D target branch (target.shape[1] == 2).
  target2 = target3[:, :2]
  loss2 = jax.block_until_ready(gaze_loss_multi(output_3d, output_2d, target2, var_o))
  ref2 = jax.block_until_ready(_reference(output_3d, output_2d, target2))
  assert jnp.allclose(loss2, ref2, rtol=5e-4, atol=5e-4), (loss2, ref2)

  print("KERNEL_OK")
</pallas_src>

<mosaic_0001>
module attributes {stable_mosaic.version = 11 : i64} {
  func.func @_gaze_loss_kernel(%arg0: memref<3x8xf32, #tpu.memory_space<vmem>>, %arg1: memref<2x8xf32, #tpu.memory_space<vmem>>, %arg2: memref<3x8xf32, #tpu.memory_space<vmem>>, %arg3: memref<1x1xf32, #tpu.memory_space<smem>>) attributes {dimension_semantics = [], scalar_prefetch = 0 : i64, scratch_operands = 0 : i64, tpu.core_type = #tpu.core_type<tc>} {
    %c0 = arith.constant 0 : index
    %c0_0 = arith.constant 0 : index
    %0 = vector.load %arg0[%c0, %c0_0] : memref<3x8xf32, #tpu.memory_space<vmem>>, vector<1x8xf32>
    %c1 = arith.constant 1 : index
    %c0_1 = arith.constant 0 : index
    %1 = vector.load %arg0[%c1, %c0_1] : memref<3x8xf32, #tpu.memory_space<vmem>>, vector<1x8xf32>
    %c0_2 = arith.constant 0 : index
    %c0_3 = arith.constant 0 : index
    %2 = vector.load %arg1[%c0_2, %c0_3] : memref<2x8xf32, #tpu.memory_space<vmem>>, vector<1x8xf32>
    %c1_4 = arith.constant 1 : index
    %c0_5 = arith.constant 0 : index
    %3 = vector.load %arg1[%c1_4, %c0_5] : memref<2x8xf32, #tpu.memory_space<vmem>>, vector<1x8xf32>
    %c0_6 = arith.constant 0 : index
    %c0_7 = arith.constant 0 : index
    %4 = vector.load %arg2[%c0_6, %c0_7] : memref<3x8xf32, #tpu.memory_space<vmem>>, vector<1x8xf32>
    %c1_8 = arith.constant 1 : index
    %c0_9 = arith.constant 0 : index
    %5 = vector.load %arg2[%c1_8, %c0_9] : memref<3x8xf32, #tpu.memory_space<vmem>>, vector<1x8xf32>
    %6 = arith.mulf %0, %0 : vector<1x8xf32>
    %7 = arith.mulf %1, %1 : vector<1x8xf32>
    %8 = arith.addf %6, %7 : vector<1x8xf32>
    %9 = arith.mulf %2, %2 : vector<1x8xf32>
    %10 = arith.mulf %3, %3 : vector<1x8xf32>
    %11 = arith.addf %9, %10 : vector<1x8xf32>
    %12 = arith.mulf %4, %4 : vector<1x8xf32>
    %13 = arith.mulf %5, %5 : vector<1x8xf32>
    %14 = arith.addf %12, %13 : vector<1x8xf32>
    %cst = arith.constant 1.000000e-24 : f32
    %15 = vector.broadcast %cst : f32 to vector<1x8xf32>
    %16 = arith.maximumf %8, %15 : vector<1x8xf32>
    %17 = math.rsqrt %16 : vector<1x8xf32>
    %cst_10 = arith.constant 1.000000e-24 : f32
    %18 = vector.broadcast %cst_10 : f32 to vector<1x8xf32>
    %19 = arith.maximumf %11, %18 : vector<1x8xf32>
    %20 = math.rsqrt %19 : vector<1x8xf32>
    %21 = arith.mulf %0, %17 : vector<1x8xf32>
    %22 = arith.mulf %2, %20 : vector<1x8xf32>
    %23 = arith.subf %21, %22 : vector<1x8xf32>
    %24 = arith.mulf %1, %17 : vector<1x8xf32>
    %25 = arith.mulf %3, %20 : vector<1x8xf32>
    %26 = arith.subf %24, %25 : vector<1x8xf32>
    %27 = math.absf %23 : vector<1x8xf32>
    %28 = math.absf %26 : vector<1x8xf32>
    %29 = tpu.concatenate %27, %28 in 0 : vector<1x8xf32>, vector<1x8xf32> -> vector<2x8xf32>
    %cst_11 = arith.constant 1.000000e-16 : f32
    %30 = vector.broadcast %cst_11 : f32 to vector<1x8xf32>
    %31 = arith.maximumf %11, %30 : vector<1x8xf32>
    %32 = math.rsqrt %31 : vector<1x8xf32>
    %cst_12 = arith.constant 1.000000e-16 : f32
    %33 = vector.broadcast %cst_12 : f32 to vector<1x8xf32>
    %34 = arith.maximumf %14, %33 : vector<1x8xf32>
    %35 = math.rsqrt %34 : vector<1x8xf32>
    %c2 = arith.constant 2 : index
    %c0_13 = arith.constant 0 : index
    %36 = vector.load %arg0[%c2, %c0_13] : memref<3x8xf32, #tpu.memory_space<vmem>>, vector<1x8xf32>
    %c2_14 = arith.constant 2 : index
    %c0_15 = arith.constant 0 : index
    %37 = vector.load %arg2[%c2_14, %c0_15] : memref<3x8xf32, #tpu.memory_space<vmem>>, vector<1x8xf32>
    %38 = arith.mulf %36, %36 : vector<1x8xf32>
    %39 = arith.addf %8, %38 : vector<1x8xf32>
    %40 = arith.mulf %37, %37 : vector<1x8xf32>
    %41 = arith.addf %14, %40 : vector<1x8xf32>
    %42 = arith.mulf %0, %4 : vector<1x8xf32>
    %43 = arith.mulf %1, %5 : vector<1x8xf32>
    %44 = arith.addf %42, %43 : vector<1x8xf32>
    %45 = arith.mulf %36, %37 : vector<1x8xf32>
    %46 = arith.addf %44, %45 : vector<1x8xf32>
    %cst_16 = arith.constant 1.000000e-16 : f32
    %47 = vector.broadcast %cst_16 : f32 to vector<1x8xf32>
    %48 = arith.maximumf %39, %47 : vector<1x8xf32>
    %49 = math.rsqrt %48 : vector<1x8xf32>
    %cst_17 = arith.constant 1.000000e-16 : f32
    %50 = vector.broadcast %cst_17 : f32 to vector<1x8xf32>
    %51 = arith.maximumf %41, %50 : vector<1x8xf32>
    %52 = math.rsqrt %51 : vector<1x8xf32>
    %53 = arith.mulf %49, %52 : vector<1x8xf32>
    %54 = arith.mulf %46, %53 : vector<1x8xf32>
    %55 = arith.mulf %2, %4 : vector<1x8xf32>
    %56 = arith.mulf %3, %5 : vector<1x8xf32>
    %57 = arith.addf %55, %56 : vector<1x8xf32>
    %58 = arith.mulf %32, %35 : vector<1x8xf32>
    %59 = arith.mulf %57, %58 : vector<1x8xf32>
    %60 = tpu.concatenate %54, %59 in 0 : vector<1x8xf32>, vector<1x8xf32> -> vector<2x8xf32>
    %cst_18 = arith.constant -1.000000e+00 : f32
    %cst_19 = arith.constant 1.000000e+00 : f32
    %61 = vector.broadcast %cst_18 : f32 to vector<2x8xf32>
    %62 = arith.maximumf %61, %60 : vector<2x8xf32>
    %63 = vector.broadcast %cst_19 : f32 to vector<2x8xf32>
    %64 = arith.minimumf %63, %62 : vector<2x8xf32>
    %65 = math.absf %64 : vector<2x8xf32>
    %66 = arith.mulf %65, %65 : vector<2x8xf32>
    %67 = arith.mulf %66, %66 : vector<2x8xf32>
    %cst_20 = arith.constant -0.0012624911 : f32
    %68 = vector.broadcast %cst_20 : f32 to vector<2x8xf32>
    %69 = arith.mulf %68, %65 : vector<2x8xf32>
    %cst_21 = arith.constant 6.670090e-03 : f32
    %70 = vector.broadcast %cst_21 : f32 to vector<2x8xf32>
    %71 = arith.addf %69, %70 : vector<2x8xf32>
    %cst_22 = arith.constant -0.0170881264 : f32
    %72 = vector.broadcast %cst_22 : f32 to vector<2x8xf32>
    %73 = arith.mulf %72, %65 : vector<2x8xf32>
    %cst_23 = arith.constant 0.0308918804 : f32
    %74 = vector.broadcast %cst_23 : f32 to vector<2x8xf32>
    %75 = arith.addf %73, %74 : vector<2x8xf32>
    %cst_24 = arith.constant -0.0501743034 : f32
    %76 = vector.broadcast %cst_24 : f32 to vector<2x8xf32>
    %77 = arith.mulf %76, %65 : vector<2x8xf32>
    %cst_25 = arith.constant 0.0889789909 : f32
    %78 = vector.broadcast %cst_25 : f32 to vector<2x8xf32>
    %79 = arith.addf %77, %78 : vector<2x8xf32>
    %cst_26 = arith.constant -0.214598805 : f32
    %80 = vector.broadcast %cst_26 : f32 to vector<2x8xf32>
    %81 = arith.mulf %80, %65 : vector<2x8xf32>
    %cst_27 = arith.constant 1.57079625 : f32
    %82 = vector.broadcast %cst_27 : f32 to vector<2x8xf32>
    %83 = arith.addf %81, %82 : vector<2x8xf32>
    %84 = arith.mulf %71, %66 : vector<2x8xf32>
    %85 = arith.addf %84, %75 : vector<2x8xf32>
    %86 = arith.mulf %85, %67 : vector<2x8xf32>
    %87 = arith.mulf %79, %66 : vector<2x8xf32>
    %88 = arith.addf %87, %83 : vector<2x8xf32>
    %89 = arith.addf %86, %88 : vector<2x8xf32>
    %cst_28 = arith.constant 1.000000e+00 : f32
    %90 = vector.broadcast %cst_28 : f32 to vector<2x8xf32>
    %91 = arith.subf %90, %65 : vector<2x8xf32>
    %cst_29 = arith.constant 0.000000e+00 : f32
    %92 = vector.broadcast %cst_29 : f32 to vector<2x8xf32>
    %93 = arith.maximumf %91, %92 : vector<2x8xf32>
    %94 = math.sqrt %93 : vector<2x8xf32>
    %95 = arith.mulf %94, %89 : vector<2x8xf32>
    %cst_30 = arith.constant 0.000000e+00 : f32
    %96 = vector.broadcast %cst_30 : f32 to vector<2x8xf32>
    %97 = arith.cmpf oge, %64, %96 : vector<2x8xf32>
    %cst_31 = arith.constant 3.14159274 : f32
    %98 = vector.broadcast %cst_31 : f32 to vector<2x8xf32>
    %99 = arith.subf %98, %95 : vector<2x8xf32>
    %100 = arith.select %97, %95, %99 : vector<2x8xi1>, vector<2x8xf32>
    %cst_32 = arith.constant 7.16197252 : f32
    %101 = vector.broadcast %cst_32 : f32 to vector<2x8xf32>
    %102 = arith.mulf %100, %101 : vector<2x8xf32>
    %cst_33 = arith.constant 6.250000e-02 : f32
    %103 = vector.broadcast %cst_33 : f32 to vector<2x8xf32>
    %104 = arith.mulf %29, %103 : vector<2x8xf32>
    %105 = arith.addf %102, %104 : vector<2x8xf32>
    %106 = vector.shape_cast %105 : vector<2x8xf32> to vector<1x2x8xf32>
    %cst_34 = arith.constant dense<0.000000e+00> : vector<1xf32>
    %107 = vector.multi_reduction <add>, %106, %cst_34 [1, 2] : vector<1x2x8xf32> to vector<1xf32>
    %108 = vector.shape_cast %107 : vector<1xf32> to vector<1x1x1xf32>
    %109 = vector.extract %108[0, 0, 0] : f32 from vector<1x1x1xf32>
    %c0_35 = arith.constant 0 : index
    %c0_36 = arith.constant 0 : index
    %110 = memref.load %arg3[%c0_35, %c0_36] : memref<1x1xf32, #tpu.memory_space<smem>>
    memref.store %109, %arg3[%c0_35, %c0_36] : memref<1x1xf32, #tpu.memory_space<smem>>
    return
  }
}

</mosaic_0001>

<llo_original>
// kernel: gaze_loss_multi.1
$region0: #{gaze_loss_multi.1}
  #allocation0 [shape = 'u32[]', space=smem, size = 0x4, offset = 0x4, fixed_abs, tag = 'smem constant byte address 0x4 - core index']
  #allocation1 [shape = 'u32[144,128]{1,0:T(1,128)}', space=vmem, size = 0x12000, scoped, tag = 'internal scratch']
  %s0 = inlined_call_operand.vmem [shape: f32[3,8], index: 0, kind: input, shape index: {}]
  %s1 = inlined_call_operand.hbm [shape: f32[2,8], index: 1, kind: input, shape index: {}]
  %s2 = inlined_call_operand.vmem [shape: f32[3,8], index: 2, kind: input, shape index: {}]
  %s3 = inlined_call_operand.hbm [shape: f32[1,1], index: 3, kind: output, shape index: {}]
  %s4 = sld [smem:[#allocation0]]
  $region26: #{gaze_loss_multi.1} parent=0
    _
  %s6 = ssub.s32 1, %s4
  %s7 = scalar_select 0, %s6, %s4
  $region1: #{gaze_loss_multi.1} parent=0
    #allocation2 [shape = 'u8[1024]{0}', space=vmem, size = 0x400, scoped, tag = 'input window, operand 1, single buffered']
    #allocation3 [shape = 's32[1]{0}', space=sflag, size = 0x4, scoped, tag = 'scoped memory for gaze_loss_multi.1']
    #allocation4 [shape = 's32[1]{0}', space=sflag, size = 0x4, scoped, tag = 'scoped memory for gaze_loss_multi.1']
    #allocation5 [shape = 'u8[512]{0}', space=smem, size = 0x200, scoped, tag = 'output window, operand 0, single buffered']
    %8 = vsyncpa [#allocation3], 0
    %9 = vsyncpa [#allocation4], 0
    // Predicated region
    $region2: #{gaze_loss_multi.1} parent=1 // pred_check
      _
    $region3: #{gaze_loss_multi.1} parent=1 // pred_check_branch
      %11 = sbr.rel (0) target = $region5
    $region4: #{gaze_loss_multi.1} parent=1 // pred_region
      _
    $region5: #{gaze_loss_multi.1} parent=1 // pred_fallthru
      _
    // Predicated region
    $region6: #{gaze_loss_multi.1} parent=1 // pred_check
      _
    $region7: #{gaze_loss_multi.1} parent=1 // pred_check_branch
      %13 = sbr.rel (0) target = $region9
    $region8: #{gaze_loss_multi.1} parent=1 // pred_region
      %s15 = ssub.s32 32, 32
      %16 = vsyncadd [#allocation3], %s15
      %s18 = sshll.u32 [#allocation2], 4
      %s19 = int_to_ptr.vmem [resolvable:$true] %s18
      %21 = dma.hbm_to_vmem [thread:$0]  %s1, 32, %s19, [#allocation3]
    $region9: #{gaze_loss_multi.1} parent=1 // pred_fallthru
      _
    // Predicated region
    $region10: #{gaze_loss_multi.1} parent=1 // pred_check
      _
    $region11: #{gaze_loss_multi.1} parent=1 // pred_check_branch
      %23 = sbr.rel (0) target = $region13
    $region12: #{gaze_loss_multi.1} parent=1 // pred_region
      _
    $region13: #{gaze_loss_multi.1} parent=1 // pred_fallthru
      _
    // Predicated region
    $region14: #{gaze_loss_multi.1} parent=1 // pred_check
      _
    $region15: #{gaze_loss_multi.1} parent=1 // pred_check_branch
      %25 = sbr.rel (0) target = $region17
    $region16: #{gaze_loss_multi.1} parent=1 // pred_region
      %26 = dma.done [#allocation3], 32
    $region17: #{gaze_loss_multi.1} parent=1 // pred_fallthru
      _
    %v27 = vld [vmem:[%s0] sm:$0x1]
    %v28 = vld [vmem:[%s0 + $0x1] sm:$0x1]
    %v29 = vld [vmem:[#allocation2] sm:$0x1]
    %v30 = vld [vmem:[#allocation2 + $0x1] sm:$0x1]
    %v31 = vld [vmem:[%s2] sm:$0x1]
    %v32 = vld [vmem:[%s2 + $0x1] sm:$0x1]
    %v33 = vmul.f32 %v27, %v27
    %v34 = vmul.f32 %v28, %v28
    %v35 = vadd.f32 %v33, %v34
    %v36 = vmul.f32 %v29, %v29
    %v37 = vmul.f32 %v30, %v30
    %v38 = vadd.f32 %v36, %v37
    %v39 = vmul.f32 %v31, %v31
    %v40 = vmul.f32 %v32, %v32
    %v41 = vadd.f32 %v39, %v40
    %v42 = vmax.f32 %v35, 1e-24
    %v43 = vrsqrt.pop %v42
    %v44 = vmax.f32 %v38, 1e-24
    %v45 = vrsqrt.pop %v44
    %v46 = vmul.f32 %v27, %v43
    %v47 = vmul.f32 %v29, %v45
    %v48 = vsub.f32 %v46, %v47
    %v49 = vmul.f32 %v28, %v43
    %v50 = vmul.f32 %v30, %v45
    %v51 = vsub.f32 %v49, %v50
    %v52 = vand.u32 2147483647, %v48
    %v53 = vand.u32 2147483647, %v51
    %v55 = vrot.slane %v53, 7
    %vm57 = vcmask 1040384
    %v58 = vsel %vm57, %v52, %v55
    %v59 = vmax.f32 %v38, 1e-16
    %v60 = vrsqrt.pop %v59
    %v61 = vmax.f32 %v41, 1e-16
    %v62 = vrsqrt.pop %v61
    %v63 = vld [vmem:[%s0 + $0x2] sm:$0x1]
    %v64 = vld [vmem:[%s2 + $0x2] sm:$0x1]
    %v65 = vmul.f32 %v63, %v63
    %v66 = vadd.f32 %v35, %v65
    %v67 = vmul.f32 %v64, %v64
    %v68 = vadd.f32 %v41, %v67
    %v69 = vmul.f32 %v27, %v31
    %v70 = vmul.f32 %v28, %v32
    %v71 = vadd.f32 %v69, %v70
    %v72 = vmul.f32 %v63, %v64
    %v73 = vadd.f32 %v71, %v72
    %v74 = vmax.f32 %v66, 1e-16
    %v75 = vrsqrt.pop %v74
    %v76 = vmax.f32 %v68, 1e-16
    %v77 = vrsqrt.pop %v76
    %v78 = vmul.f32 %v75, %v77
    %v79 = vmul.f32 %v73, %v78
    %v80 = vmul.f32 %v29, %v31
    %v81 = vmul.f32 %v30, %v32
    %v82 = vadd.f32 %v80, %v81
    %v83 = vmul.f32 %v60, %v62
    %v84 = vmul.f32 %v82, %v83
    %v86 = vrot.slane %v84, 7
    %v88 = vsel %vm57, %v79, %v86
    %v89 = vmax.f32 %v88, -1.0
    %v90 = vmin.f32 %v89, 1.0
    %v91 = vand.u32 2147483647, %v90
    %v92 = vmul.f32 %v91, %v91
    %v93 = vmul.f32 %v92, %v92
    %v94 = vmul.f32 %v91, -0.0012624911
    %v95 = vadd.f32 %v94, 0.00667009
    %v96 = vmul.f32 %v91, -0.017088126
    %v97 = vadd.f32 %v96, 0.03089188
    %v98 = vmul.f32 %v91, -0.050174303
    %v99 = vadd.f32 %v98, 0.08897899
    %v100 = vmul.f32 %v91, -0.2145988
    %v101 = vadd.f32 %v100, 1.5707963
    %v102 = vmul.f32 %v95, %v92
    %v103 = vadd.f32 %v102, %v97
    %v104 = vmul.f32 %v103, %v93
    %v105 = vmul.f32 %v99, %v92
    %v106 = vadd.f32 %v105, %v101
    %v107 = vadd.f32 %v104, %v106
    %v108 = vsub.f32 1.0, %v91
    %v109 = vmax.f32 %v108, 0.0
    %v110 = vrsqrt.pop %v109
    %v111 = vmul.f32 %v109, %v110
    %vm112 = vcmp.eq.f32.partialorder %v109, inf
    %v113 = vsel %vm112, %v109, %v111
    %vm114 = vcmp.eq.f32.partialorder %v109, 0.0
    %v115 = vand.u32 %v109, 2147483648
    %v116 = vsel %vm114, %v115, %v113
    %v117 = vmul.f32 %v116, %v107
    %vm118 = vcmp.ge.f32.partialorder %v90, 0.0
    %v119 = vsub.f32 3.1415927, %v117
    %v120 = vsel %vm118, %v117, %v119
    %v121 = vmul.f32 %v120, 7.1619725
    %v122 = vmul.f32 %v58, 0.0625
    %v123 = vadd.f32 %v121, %v122
    %vm124 = vcmask 58368
    %v125 = vsel %vm124, %v123, 0.0
    %126 = vadd.xlane.f32.xlu0 %v125
    %v127 = vpop.xlane.xlu0 %126
    %v128 = vrot.slane %v127, 4
    %v129 = vadd.f32 %v127, %v128
    %v130 = vrot.slane %v129, 2
    %v131 = vadd.f32 %v129, %v130
    %v132 = vrot.slane %v131, 1
    %v133 = vadd.f32 %v131, %v132
    %s134 = vtos %v133
    %s135 = scalar_lea.smem [#allocation5], 0
    %136 = sst [smem:[%s135]] %s134
    // Predicated region
    $region18: #{gaze_loss_multi.1} parent=1 // pred_check
      _
    $region19: #{gaze_loss_multi.1} parent=1 // pred_check_branch
      %138 = sbr.rel (0) target = $region21
    $region20: #{gaze_loss_multi.1} parent=1 // pred_region
      %s140 = ssub.s32 16, 16
      %141 = vsyncadd [#allocation4], %s140
      %144 = dma.smem_to_hbm [#allocation5], 16, %s3, [#allocation4]
    $region21: #{gaze_loss_multi.1} parent=1 // pred_fallthru
      _
    // Predicated region
    $region22: #{gaze_loss_multi.1} parent=1 // pred_check
      _
    $region23: #{gaze_loss_multi.1} parent=1 // pred_check_branch
      %146 = sbr.rel (0) target = $region25
    $region24: #{gaze_loss_multi.1} parent=1 // pred_region
      %147 = dma.done [#allocation4], 16
    $region25: #{gaze_loss_multi.1} parent=1 // pred_fallthru
      _
    %148 = sfence
    %149 = vsyncpa [#allocation3], 1
    %150 = vsyncpa [#allocation4], 1

</llo_original>
